<compile_context>
chip_gen: v7x
topology: tpu7x:2x2x1
jax: 0.10.0
libtpu: 0.0.40
codegen_flags: <defaults>
</compile_context>

<pallas_src>
import functools
from typing import NamedTuple, Optional

import jax
import jax.numpy as jnp
from jax.experimental import pallas as pl
from jax.experimental.pallas import tpu as pltpu


def _round_up(x: int, m: int) -> int:
    return (x + m - 1) // m * m


def _vmem_capacity_bytes() -> int:
    """Physical per-core VMEM (generation-aware); conservative fallback."""
    try:
        return int(pltpu.get_tpu_info().vmem_capacity_bytes)
    except Exception:
        return 64 * 1024 * 1024  # v7x per-TensorCore VMEM (smallest of the family)


def _vmem_estimate(bt: int, tn: int, dim_p: int, w_bytes: int, a_bytes: int) -> int:
    """Rough double-buffered VMEM footprint of one grid step."""
    return (2 * (dim_p * 2 * tn + tn * dim_p) * w_bytes   # w13 + w2 tiles, 2-deep
            + 2 * 2 * bt * dim_p * a_bytes                # x / out tiles, 2-deep
            + bt * dim_p * 4                              # f32 accumulator
            + bt * 2 * tn * 4)                            # h13 intermediate (f32)


class FFNWeights(NamedTuple):
    """One-time prepared (padded, bf16, interleaved) FFN weights."""
    w13: jax.Array     # (dim_p, nt * 2 * tn): per hidden tile [gate | up]
    w2: jax.Array      # (hidden_p, dim_p)
    dim: int
    hidden: int
    tn: int            # hidden tile size used for the interleave


def prepare_weights(w1, w3, w2, *, block_hidden: int = 512,
                    weight_dtype=jnp.bfloat16) -> FFNWeights:
    """Pad feature dims to lane multiples, cast to bf16, interleave W1/W3.

    Done ONCE at weight-load time so the jitted forward never touches the raw
    weights again (removes per-call pad/concat HBM traffic).
    w1, w3: [dim, hidden] ; w2: [hidden, dim]  (transpose of torch.nn.Linear).
    """
    dim, hidden = w1.shape
    dim_p = _round_up(dim, 128)
    tn = _round_up(min(block_hidden, _round_up(hidden, 128)), 128)
    hidden_p = _round_up(hidden, tn)
    nt = hidden_p // tn

    w1_p = jnp.pad(w1.astype(weight_dtype),
                   ((0, dim_p - dim), (0, hidden_p - hidden)))
    w3_p = jnp.pad(w3.astype(weight_dtype),
                   ((0, dim_p - dim), (0, hidden_p - hidden)))
    w2_p = jnp.pad(w2.astype(weight_dtype),
                   ((0, hidden_p - hidden), (0, dim_p - dim)))

    # Fuse W1/W3 per hidden tile: [tile0: gate|up, tile1: gate|up, ...] so each
    # grid step DMAs one contiguous (dim_p, 2*tn) block.
    w13 = jnp.concatenate(
        [w1_p.reshape(dim_p, nt, tn), w3_p.reshape(dim_p, nt, tn)], axis=-1
    ).reshape(dim_p, nt * 2 * tn)

    return FFNWeights(w13=w13, w2=w2_p, dim=dim, hidden=hidden, tn=tn)


def _ffn_kernel(x_ref, w13_ref, w2_ref, o_ref, acc_ref, *, tn_hidden):
    """Grid point (i, j): token tile i, hidden tile j.

    o[i] = sum_j ( silu(x_i @ W1_j) * (x_i @ W3_j) ) @ W2_j
    """
    j = pl.program_id(1)

    @pl.when(j == 0)
    def _init():
        acc_ref[...] = jnp.zeros_like(acc_ref)

    x = x_ref[...]  # bf16 -> MXU native
    # Fused gate+up projection: one (bt, dim) @ (dim, 2*tn) matmul, f32 accum.
    h13 = jnp.dot(x, w13_ref[...], preferred_element_type=jnp.float32)
    h1 = h13[:, :tn_hidden]          # gate (lane-aligned: tn % 128 == 0)
    h3 = h13[:, tn_hidden:]          # up
    # SwiGLU elementwise in f32 (VPU + EUP).  Kept f32 on all generations:
    # v5e has no bf16 VPU/EUP datapath and the stage is not the bottleneck.
    h = (h1 * jax.nn.sigmoid(h1)) * h3
    # Down projection for this hidden tile, accumulate into f32 VMEM scratch.
    acc_ref[...] += jnp.dot(h.astype(w2_ref.dtype), w2_ref[...],
                            preferred_element_type=jnp.float32)

    @pl.when(j == pl.num_programs(1) - 1)
    def _finalize():
        o_ref[...] = acc_ref[...].astype(o_ref.dtype)


@functools.partial(
    jax.jit, static_argnames=("dim", "tn", "block_tokens", "compute_dtype"))
def feed_forward(x, w13, w2_p, *, dim: int, tn: int,
                 block_tokens: int = 512, compute_dtype=jnp.bfloat16):
    """x: [..., dim] -> [..., dim] SwiGLU FFN via a Pallas TPU kernel.

    w13 / w2_p are the pre-padded, pre-interleaved weights from
    prepare_weights(); tn is the hidden tile size they were built with.
    """
    orig_shape = x.shape
    assert orig_shape[-1] == dim, "dim must match x's last axis"
    out_dtype = x.dtype

    x2d = x.reshape(-1, dim).astype(compute_dtype)
    tokens = x2d.shape[0]

    dim_p = w13.shape[0]
    hidden_p = w2_p.shape[0]
    nt = hidden_p // tn

    w_bytes = jnp.dtype(w13.dtype).itemsize
    a_bytes = jnp.dtype(compute_dtype).itemsize
    packing = 8 * (4 // a_bytes)             # sublane packing: f32->8, bf16->16, i8->32

    # Generation-aware VMEM cap (64 MiB/TC on v7x, 128 MiB on v5e/v6e).
    cap = _vmem_capacity_bytes() - (8 << 20)  # headroom for Mosaic internals

    # Token tile: large for MXU occupancy / arithmetic intensity, clamped for
    # tiny inputs, rounded to sublane packing, shrunk if VMEM would overflow.
    bt = _round_up(min(block_tokens, _round_up(tokens, packing)), packing)
    while _vmem_estimate(bt, tn, dim_p, w_bytes, a_bytes) > cap and bt > packing:
        bt = max(packing, _round_up(bt // 2, packing))

    tokens_p = _round_up(tokens, bt)
    n_token_tiles = tokens_p // bt
    # TODO(synk): for decode-like shapes with a single token tile on v7x, split
    # the hidden/reduction axis into two per-core partial sums (extra leading
    # core axis + final add) so both TensorCores are used.

    x_p = jnp.pad(x2d, ((0, tokens_p - tokens), (0, dim_p - dim)))

    est = _vmem_estimate(bt, tn, dim_p, w_bytes, a_bytes)
    vmem_limit = int(min(cap, max(32 * 1024 * 1024, int(est * 1.3) + (4 << 20))))

    cost = pl.CostEstimate(
        flops=6 * tokens_p * dim_p * hidden_p,
        transcendentals=tokens_p * hidden_p,
        bytes_accessed=(3 * dim_p * hidden_p * w_bytes * n_token_tiles   # w13 + w2 streams
                        + tokens_p * dim_p
                        * (a_bytes + jnp.dtype(out_dtype).itemsize)),     # x in, out
    )

    kernel = functools.partial(_ffn_kernel, tn_hidden=tn)

    # NOTE: if the w13 DMA is still exposed on v6e at large bt, the w13 spec can
    # take pipeline_mode=pl.Buffered(3); skipped by default to keep the v7x
    # (64 MiB) budget intact.
    out_p = pl.pallas_call(
        kernel,
        out_shape=jax.ShapeDtypeStruct((tokens_p, dim_p), out_dtype),
        grid_spec=pltpu.PrefetchScalarGridSpec(
            num_scalar_prefetch=0,
            grid=(n_token_tiles, nt),
            in_specs=[
                pl.BlockSpec((bt, dim_p), lambda i, j: (i, 0)),        # x tile
                pl.BlockSpec((dim_p, 2 * tn), lambda i, j: (0, j)),    # fused W1|W3 tile
                pl.BlockSpec((tn, dim_p), lambda i, j: (j, 0)),        # W2 tile
            ],
            out_specs=pl.BlockSpec((bt, dim_p), lambda i, j: (i, 0)),
            scratch_shapes=[pltpu.VMEM((bt, dim_p), jnp.float32)],
        ),
        compiler_params=pltpu.CompilerParams(
            dimension_semantics=("parallel", "arbitrary"),
            vmem_limit_bytes=vmem_limit,
        ),
        cost_estimate=cost,
    )(x_p, w13, w2_p)

    return out_p[:tokens, :dim].reshape(orig_shape)


def make_params(key, dim, hidden_dim, multiple_of, ffn_dim_multiplier=None,
                dtype=jnp.float32):
    """Deterministic synthetic weights with LLaMA FFN hidden-dim rule."""
    hidden_dim = int(2 * hidden_dim / 3)
    if ffn_dim_multiplier is not None:
        hidden_dim = int(ffn_dim_multiplier * hidden_dim)
    hidden_dim = multiple_of * ((hidden_dim + multiple_of - 1) // multiple_of)

    k1, k2, k3 = jax.random.split(key, 3)
    # Stored as (in, out) so the kernel computes x @ W directly
    # (torch.nn.Linear stores (out, in); this is just its transpose).
    w1 = jax.random.normal(k1, (dim, hidden_dim), dtype) / jnp.sqrt(dim)
    w3 = jax.random.normal(k2, (dim, hidden_dim), dtype) / jnp.sqrt(dim)
    w2 = jax.random.normal(k3, (hidden_dim, dim), dtype) / jnp.sqrt(hidden_dim)
    return w1, w3, w2, hidden_dim


if __name__ == "__main__":
    key = jax.random.PRNGKey(0)
    kx, kp = jax.random.split(key)

    batch, seq, dim = 2, 8, 128
    # Same convention as LLaMA: pass 4*dim as the pre-adjustment hidden_dim.
    w1, w3, w2, hidden_dim = make_params(kp, dim, 4 * dim,
                                         multiple_of=128,
                                         ffn_dim_multiplier=None)

    # One-time weight preparation (pad + bf16 cast + W1/W3 interleave).
    prep = prepare_weights(w1, w3, w2)

    x = jax.random.normal(kx, (batch, seq, dim), jnp.float32)

    out = feed_forward(x, prep.w13, prep.w2, dim=prep.dim, tn=prep.tn)
    out = jax.block_until_ready(out)
    assert out.shape == (batch, seq, dim)

    # Reference with the same bf16 operands / f32 accumulation as the kernel.
    x2d = x.reshape(-1, dim).astype(jnp.bfloat16)
    w1b = w1.astype(jnp.bfloat16)
    w3b = w3.astype(jnp.bfloat16)
    w2b = w2.astype(jnp.bfloat16)
    h1 = jnp.dot(x2d, w1b, preferred_element_type=jnp.float32)
    h3 = jnp.dot(x2d, w3b, preferred_element_type=jnp.float32)
    h = h1 * jax.nn.sigmoid(h1) * h3
    ref = jnp.dot(h.astype(jnp.bfloat16), w2b,
                  preferred_element_type=jnp.float32)
    ref = ref.reshape(batch, seq, dim).astype(x.dtype)
    assert jnp.allclose(out, ref, atol=2e-2, rtol=2e-2), (
        float(jnp.max(jnp.abs(out - ref))))

    # Coarse sanity check against the pure-f32 SwiGLU math (bf16 quantization
    # of the MXU operands is the only difference).
    h1f = x @ w1
    ref32 = (h1f * jax.nn.sigmoid(h1f) * (x @ w3)) @ w2
    assert jnp.allclose(out, ref32, atol=1e-1, rtol=1e-1), (
        float(jnp.max(jnp.abs(out - ref32))))

    print("KERNEL_OK")
</pallas_src>

<mosaic_0001>
module attributes {stable_mosaic.version = 11 : i64} {
  func.func @_ffn_kernel(%arg0: i32, %arg1: i32, %arg2: memref<16x128xbf16, #tpu.memory_space<vmem>>, %arg3: memref<128x768xbf16, #tpu.memory_space<vmem>>, %arg4: memref<384x128xbf16, #tpu.memory_space<vmem>>, %arg5: memref<16x128xf32, #tpu.memory_space<vmem>>, %arg6: memref<16x128xf32, #tpu.memory_space<vmem>>) attributes {dimension_semantics = [#tpu.dimension_semantics<parallel>, #tpu.dimension_semantics<arbitrary>], iteration_bounds = array<i64: 1, 1>, scalar_prefetch = 0 : i64, scratch_operands = 1 : i64, tpu.core_type = #tpu.core_type<tc>, window_params = [{transform_indices = @transform_0, window_bounds = array<i64: 16, 128>}, {transform_indices = @transform_1, window_bounds = array<i64: 128, 768>}, {transform_indices = @transform_2, window_bounds = array<i64: 384, 128>}, {transform_indices = @transform_3, window_bounds = array<i64: 16, 128>}]} {
    %c0_i32 = arith.constant 0 : i32
    %0 = arith.cmpi eq, %arg1, %c0_i32 : i32
    %1 = arith.extui %0 : i1 to i32
    %c0_i32_0 = arith.constant 0 : i32
    %2 = arith.cmpi ne, %1, %c0_i32_0 : i32
    scf.if %2 {
      %cst_14 = arith.constant 0.000000e+00 : f32
      %24 = vector.broadcast %cst_14 : f32 to vector<16x128xf32>
      %c0_15 = arith.constant 0 : index
      %c0_16 = arith.constant 0 : index
      %25 = vector.load %arg6[%c0_15, %c0_16] : memref<16x128xf32, #tpu.memory_space<vmem>>, vector<16x128xf32>
      tpu.vector_store %arg6[%c0_15, %c0_16], %24 {strides = array<i32>} : memref<16x128xf32, #tpu.memory_space<vmem>>, vector<16x128xf32>,
    } else {
    }
    %c0 = arith.constant 0 : index
    %c0_1 = arith.constant 0 : index
    %3 = vector.load %arg2[%c0, %c0_1] : memref<16x128xbf16, #tpu.memory_space<vmem>>, vector<16x128xbf16>
    %c0_2 = arith.constant 0 : index
    %c0_3 = arith.constant 0 : index
    %4 = vector.load %arg3[%c0_2, %c0_3] : memref<128x768xbf16, #tpu.memory_space<vmem>>, vector<128x768xbf16>
    %cst = arith.constant dense<0.000000e+00> : vector<16x768xf32>
    %5 = tpu.matmul %3, %4, %cst {dimension_numbers = #tpu.dot_dimension_numbers<[1], [0], [0], [1], [0, 0, 1, 1], [], []>} : vector<16x128xbf16>, vector<128x768xbf16>, vector<16x768xf32> -> vector<16x768xf32>
    %6 = vector.extract_strided_slice %5 {offsets = [0, 0], sizes = [16, 384], strides = [1, 1]} : vector<16x768xf32> to vector<16x384xf32>
    %7 = vector.extract_strided_slice %5 {offsets = [0, 384], sizes = [16, 384], strides = [1, 1]} : vector<16x768xf32> to vector<16x384xf32>
    %8 = arith.negf %6 : vector<16x384xf32>
    %9 = math.exp %8 : vector<16x384xf32>
    %cst_4 = arith.constant 1.000000e+00 : f32
    %10 = vector.broadcast %cst_4 : f32 to vector<16x384xf32>
    %11 = arith.addf %10, %9 : vector<16x384xf32>
    %12 = arith.divf %10, %11 : vector<16x384xf32>
    %13 = arith.mulf %6, %12 : vector<16x384xf32>
    %14 = arith.mulf %13, %7 : vector<16x384xf32>
    %c0_5 = arith.constant 0 : index
    %c0_6 = arith.constant 0 : index
    %15 = vector.load %arg6[%c0_5, %c0_6] : memref<16x128xf32, #tpu.memory_space<vmem>>, vector<16x128xf32>
    %16 = arith.truncf %14 : vector<16x384xf32> to vector<16x384xbf16>
    %c0_7 = arith.constant 0 : index
    %c0_8 = arith.constant 0 : index
    %17 = vector.load %arg4[%c0_7, %c0_8] : memref<384x128xbf16, #tpu.memory_space<vmem>>, vector<384x128xbf16>
    %cst_9 = arith.constant dense<0.000000e+00> : vector<16x128xf32>
    %18 = tpu.matmul %16, %17, %cst_9 {dimension_numbers = #tpu.dot_dimension_numbers<[1], [0], [0], [1], [0, 0, 1, 1], [], []>} : vector<16x384xbf16>, vector<384x128xbf16>, vector<16x128xf32> -> vector<16x128xf32>
    %19 = arith.addf %15, %18 : vector<16x128xf32>
    %c0_10 = arith.constant 0 : index
    %c0_11 = arith.constant 0 : index
    %20 = vector.load %arg6[%c0_10, %c0_11] : memref<16x128xf32, #tpu.memory_space<vmem>>, vector<16x128xf32>
    tpu.vector_store %arg6[%c0_10, %c0_11], %19 {strides = array<i32>} : memref<16x128xf32, #tpu.memory_space<vmem>>, vector<16x128xf32>,
    %c0_i32_12 = arith.constant 0 : i32
    %21 = arith.cmpi eq, %arg1, %c0_i32_12 : i32
    %22 = arith.extui %21 : i1 to i32
    %c0_i32_13 = arith.constant 0 : i32
    %23 = arith.cmpi ne, %22, %c0_i32_13 : i32
    scf.if %23 {
      %c0_14 = arith.constant 0 : index
      %c0_15 = arith.constant 0 : index
      %24 = vector.load %arg6[%c0_14, %c0_15] : memref<16x128xf32, #tpu.memory_space<vmem>>, vector<16x128xf32>
      %c0_16 = arith.constant 0 : index
      %c0_17 = arith.constant 0 : index
      %25 = vector.load %arg5[%c0_16, %c0_17] : memref<16x128xf32, #tpu.memory_space<vmem>>, vector<16x128xf32>
      tpu.vector_store %arg5[%c0_16, %c0_17], %24 {strides = array<i32>} : memref<16x128xf32, #tpu.memory_space<vmem>>, vector<16x128xf32>,
    } else {
    }
    return
  }
  func.func @transform_0(%arg0: i32, %arg1: i32) -> (i32, i32) {
    %c0_i32 = arith.constant 0 : i32
    %c0_i32_0 = arith.constant 0 : i32
    return %arg0, %c0_i32 : i32, i32
  }
  func.func @transform_1(%arg0: i32, %arg1: i32) -> (i32, i32) {
    %c0_i32 = arith.constant 0 : i32
    %c0_i32_0 = arith.constant 0 : i32
    return %c0_i32, %arg1 : i32, i32
  }
  func.func @transform_2(%arg0: i32, %arg1: i32) -> (i32, i32) {
    %c0_i32 = arith.constant 0 : i32
    %c0_i32_0 = arith.constant 0 : i32
    return %arg1, %c0_i32 : i32, i32
  }
  func.func @transform_3(%arg0: i32, %arg1: i32) -> (i32, i32) {
    %c0_i32 = arith.constant 0 : i32
    %c0_i32_0 = arith.constant 0 : i32
    return %arg0, %c0_i32 : i32, i32
  }
}

</mosaic_0001>

<llo_original>
// kernel: feed_forward.1
$region0: #{feed_forward.1}
  #allocation0 [shape = 'u32[]', space=smem, size = 0x4, offset = 0x4, fixed_abs, tag = 'smem constant byte address 0x4 - core index']
  #allocation1 [shape = 'u32[144,128]{1,0:T(1,128)}', space=vmem, size = 0x12000, scoped, tag = 'internal scratch']
  #allocation2 [shape = 'f32[16,128]{1,0:T(8,128)}', space=vmem, size = 0x2000, scoped, tag = 'scratch operand']
  %s0 = inlined_call_operand.vmem [shape: bf16[16,128], index: 0, kind: input, shape index: {}]
  %s1 = inlined_call_operand.hbm [shape: bf16[128,768], index: 1, kind: input, shape index: {}]
  %s2 = inlined_call_operand.hbm [shape: bf16[384,128], index: 2, kind: input, shape index: {}]
  %s3 = inlined_call_operand.hbm [shape: f32[16,128], index: 3, kind: output, shape index: {}]
  %s4 = sld [smem:[#allocation0]]
  $region38: #{feed_forward.1} parent=0
    _
  %s6 = ssub.s32 1, %s4
  %s7 = scalar_select 0, %s6, %s4
  $region1: #{feed_forward.1} parent=0
    #allocation3 [shape = 'u8[196608]{0}', space=vmem, size = 0x30000, scoped, tag = 'input window, operand 1, single buffered']
    #allocation4 [shape = 's32[1]{0}', space=sflag, size = 0x4, scoped, tag = 'scoped memory for feed_forward.1']
    #allocation5 [shape = 's32[1]{0}', space=sflag, size = 0x4, scoped, tag = 'scoped memory for feed_forward.1']
    #allocation6 [shape = 'u8[98304]{0}', space=vmem, size = 0x18000, scoped, tag = 'input window, operand 2, single buffered']
    #allocation7 [shape = 's32[1]{0}', space=sflag, size = 0x4, scoped, tag = 'scoped memory for feed_forward.1']
    #allocation8 [shape = 'u8[8192]{0}', space=vmem, size = 0x2000, scoped, tag = 'output window, operand 0, single buffered']
    %8 = vsyncpa [#allocation4], 0
    %9 = vsyncpa [#allocation7], 0
    %10 = vsyncpa [#allocation5], 0
    // Predicated region
    $region2: #{feed_forward.1} parent=1 // pred_check
      _
    $region3: #{feed_forward.1} parent=1 // pred_check_branch
      %12 = sbr.rel (0) target = $region5
    $region4: #{feed_forward.1} parent=1 // pred_region
      _
    $region5: #{feed_forward.1} parent=1 // pred_fallthru
      _
    // Predicated region
    $region6: #{feed_forward.1} parent=1 // pred_check
      _
    $region7: #{feed_forward.1} parent=1 // pred_check_branch
      %14 = sbr.rel (0) target = $region9
    $region8: #{feed_forward.1} parent=1 // pred_region
      %s16 = ssub.s32 6144, 6144
      %17 = vsyncadd [#allocation4], %s16
      %s18 = sshll.u32 [#allocation3], 4
      %s19 = int_to_ptr.vmem [resolvable:$true] %s18
      %24 = dma.hbm_to_vmem [thread:$0]  %s1, 6144, %s19, [#allocation4], 384, 384, 24
    $region9: #{feed_forward.1} parent=1 // pred_fallthru
      _
    // Predicated region
    $region10: #{feed_forward.1} parent=1 // pred_check
      _
    $region11: #{feed_forward.1} parent=1 // pred_check_branch
      %26 = sbr.rel (0) target = $region13
    $region12: #{feed_forward.1} parent=1 // pred_region
      %s28 = ssub.s32 3072, 3072
      %29 = vsyncadd [#allocation7], %s28
      %s30 = sshll.u32 [#allocation6], 4
      %s31 = int_to_ptr.vmem [resolvable:$true] %s30
      %36 = dma.hbm_to_vmem [thread:$0]  %s2, 3072, %s31, [#allocation7], 64, 64, 4
    $region13: #{feed_forward.1} parent=1 // pred_fallthru
      _
    // Predicated region
    $region14: #{feed_forward.1} parent=1 // pred_check
      _
    $region15: #{feed_forward.1} parent=1 // pred_check_branch
      %38 = sbr.rel (0) target = $region17
    $region16: #{feed_forward.1} parent=1 // pred_region
      %39 = dma.done [#allocation4], 6144
    $region17: #{feed_forward.1} parent=1 // pred_fallthru
      _
    // Predicated region
    $region18: #{feed_forward.1} parent=1 // pred_check
      _
    $region19: #{feed_forward.1} parent=1 // pred_check_branch
      %41 = sbr.rel (0) target = $region21
    $region20: #{feed_forward.1} parent=1 // pred_region
      %42 = dma.done [#allocation7], 3072
    $region21: #{feed_forward.1} parent=1 // pred_fallthru
      _
    %p44 = scmp.eq.s32.totalorder 0, 0
    // Predicated region
    $region22: #{feed_forward.1} parent=1 // pred_check
      %p45 = pneg %p44
    $region23: #{feed_forward.1} parent=1 // pred_check_branch
      %47 = sbr.rel (%p45) target = $region25
    $region24: #{feed_forward.1} parent=1 // pred_region
      %48 = vst [vmem:[#allocation2] sm:$0xff] 0.0
      %49 = vst [vmem:[#allocation2 + $0x8] sm:$0xff] 0.0
    $region25: #{feed_forward.1} parent=1 // pred_fallthru
      _
    %v50 = vld [vmem:[%s0] sm:$0xf]
    %v51 = vld [vmem:[%s0 + $0x4] sm:$0xf]
    %v52 = vld [vmem:[#allocation3] sm:$0xff]
    %v53 = vld [vmem:[#allocation3 + $0x8] sm:$0xff]
    %v54 = vld [vmem:[#allocation3 + $0x10] sm:$0xff]
    %v55 = vld [vmem:[#allocation3 + $0x18] sm:$0xff]
    %v56 = vld [vmem:[#allocation3 + $0x20] sm:$0xff]
    %v57 = vld [vmem:[#allocation3 + $0x28] sm:$0xff]
    %v58 = vld [vmem:[#allocation3 + $0x30] sm:$0xff]
    %v59 = vld [vmem:[#allocation3 + $0x38] sm:$0xff]
    %v60 = vld [vmem:[#allocation3 + $0x40] sm:$0xff]
    %v61 = vld [vmem:[#allocation3 + $0x48] sm:$0xff]
    %v62 = vld [vmem:[#allocation3 + $0x50] sm:$0xff]
    %v63 = vld [vmem:[#allocation3 + $0x58] sm:$0xff]
    %v64 = vld [vmem:[#allocation3 + $0x60] sm:$0xff]
    %v65 = vld [vmem:[#allocation3 + $0x68] sm:$0xff]
    %v66 = vld [vmem:[#allocation3 + $0x70] sm:$0xff]
    %v67 = vld [vmem:[#allocation3 + $0x78] sm:$0xff]
    %v68 = vld [vmem:[#allocation3 + $0x80] sm:$0xff]
    %v69 = vld [vmem:[#allocation3 + $0x88] sm:$0xff]
    %v70 = vld [vmem:[#allocation3 + $0x90] sm:$0xff]
    %v71 = vld [vmem:[#allocation3 + $0x98] sm:$0xff]
    %v72 = vld [vmem:[#allocation3 + $0xa0] sm:$0xff]
    %v73 = vld [vmem:[#allocation3 + $0xa8] sm:$0xff]
    %v74 = vld [vmem:[#allocation3 + $0xb0] sm:$0xff]
    %v75 = vld [vmem:[#allocation3 + $0xb8] sm:$0xff]
    %v76 = vld [vmem:[#allocation3 + $0xc0] sm:$0xff]
    %v77 = vld [vmem:[#allocation3 + $0xc8] sm:$0xff]
    %v78 = vld [vmem:[#allocation3 + $0xd0] sm:$0xff]
    %v79 = vld [vmem:[#allocation3 + $0xd8] sm:$0xff]
    %v80 = vld [vmem:[#allocation3 + $0xe0] sm:$0xff]
    %v81 = vld [vmem:[#allocation3 + $0xe8] sm:$0xff]
    %v82 = vld [vmem:[#allocation3 + $0xf0] sm:$0xff]
    %v83 = vld [vmem:[#allocation3 + $0xf8] sm:$0xff]
    %v84 = vld [vmem:[#allocation3 + $0x100] sm:$0xff]
    %v85 = vld [vmem:[#allocation3 + $0x108] sm:$0xff]
    %v86 = vld [vmem:[#allocation3 + $0x110] sm:$0xff]
    %v87 = vld [vmem:[#allocation3 + $0x118] sm:$0xff]
    %v88 = vld [vmem:[#allocation3 + $0x120] sm:$0xff]
    %v89 = vld [vmem:[#allocation3 + $0x128] sm:$0xff]
    %v90 = vld [vmem:[#allocation3 + $0x130] sm:$0xff]
    %v91 = vld [vmem:[#allocation3 + $0x138] sm:$0xff]
    %v92 = vld [vmem:[#allocation3 + $0x140] sm:$0xff]
    %v93 = vld [vmem:[#allocation3 + $0x148] sm:$0xff]
    %v94 = vld [vmem:[#allocation3 + $0x150] sm:$0xff]
    %v95 = vld [vmem:[#allocation3 + $0x158] sm:$0xff]
    %v96 = vld [vmem:[#allocation3 + $0x160] sm:$0xff]
    %v97 = vld [vmem:[#allocation3 + $0x168] sm:$0xff]
    %v98 = vld [vmem:[#allocation3 + $0x170] sm:$0xff]
    %v99 = vld [vmem:[#allocation3 + $0x178] sm:$0xff]
    %v102 = vunpack.c.l.b16 %v50
    %v103 = vunpack.c.l.b16 %v51
    %v104 = vpack.c.b16 %v103, %v102
    %v154 = vunpack.c.l.b16 %v52
    %v155 = vunpack.c.h.b16 %v52
    %v156 = vunpack.c.l.b16 %v53
    %v157 = vunpack.c.h.b16 %v53
    %v158 = vunpack.c.l.b16 %v54
    %v159 = vunpack.c.h.b16 %v54
    %v160 = vunpack.c.l.b16 %v55
    %v161 = vunpack.c.h.b16 %v55
    %v162 = vunpack.c.l.b16 %v56
    %v163 = vunpack.c.h.b16 %v56
    %v164 = vunpack.c.l.b16 %v57
    %v165 = vunpack.c.h.b16 %v57
    %v166 = vunpack.c.l.b16 %v58
    %v167 = vunpack.c.h.b16 %v58
    %v168 = vunpack.c.l.b16 %v59
    %v169 = vunpack.c.h.b16 %v59
    %v170 = vunpack.c.l.b16 %v60
    %v171 = vunpack.c.h.b16 %v60
    %v172 = vunpack.c.l.b16 %v61
    %v173 = vunpack.c.h.b16 %v61
    %v174 = vunpack.c.l.b16 %v62
    %v175 = vunpack.c.h.b16 %v62
    %v176 = vunpack.c.l.b16 %v63
    %v177 = vunpack.c.h.b16 %v63
    %v178 = vunpack.c.l.b16 %v64
    %v179 = vunpack.c.h.b16 %v64
    %v180 = vunpack.c.l.b16 %v65
    %v181 = vunpack.c.h.b16 %v65
    %v182 = vunpack.c.l.b16 %v66
    %v183 = vunpack.c.h.b16 %v66
    %v184 = vunpack.c.l.b16 %v67
    %v185 = vunpack.c.h.b16 %v67
    %v186 = vunpack.c.l.b16 %v68
    %v187 = vunpack.c.h.b16 %v68
    %v188 = vunpack.c.l.b16 %v69
    %v189 = vunpack.c.h.b16 %v69
    %v190 = vunpack.c.l.b16 %v70
    %v191 = vunpack.c.h.b16 %v70
    %v192 = vunpack.c.l.b16 %v71
    %v193 = vunpack.c.h.b16 %v71
    %v194 = vunpack.c.l.b16 %v72
    %v195 = vunpack.c.h.b16 %v72
    %v196 = vunpack.c.l.b16 %v73
    %v197 = vunpack.c.h.b16 %v73
    %v198 = vunpack.c.l.b16 %v74
    %v199 = vunpack.c.h.b16 %v74
    %v200 = vunpack.c.l.b16 %v75
    %v201 = vunpack.c.h.b16 %v75
    %v202 = vunpack.c.l.b16 %v76
    %v203 = vunpack.c.h.b16 %v76
    %v204 = vunpack.c.l.b16 %v77
    %v205 = vunpack.c.h.b16 %v77
    %v206 = vunpack.c.l.b16 %v78
    %v207 = vunpack.c.h.b16 %v78
    %v208 = vunpack.c.l.b16 %v79
    %v209 = vunpack.c.h.b16 %v79
    %v210 = vunpack.c.l.b16 %v80
    %v211 = vunpack.c.h.b16 %v80
    %v212 = vunpack.c.l.b16 %v81
    %v213 = vunpack.c.h.b16 %v81
    %v214 = vunpack.c.l.b16 %v82
    %v215 = vunpack.c.h.b16 %v82
    %v216 = vunpack.c.l.b16 %v83
    %v217 = vunpack.c.h.b16 %v83
    %v218 = vunpack.c.l.b16 %v84
    %v219 = vunpack.c.h.b16 %v84
    %v220 = vunpack.c.l.b16 %v85
    %v221 = vunpack.c.h.b16 %v85
    %v222 = vunpack.c.l.b16 %v86
    %v223 = vunpack.c.h.b16 %v86
    %v224 = vunpack.c.l.b16 %v87
    %v225 = vunpack.c.h.b16 %v87
    %v226 = vunpack.c.l.b16 %v88
    %v227 = vunpack.c.h.b16 %v88
    %v228 = vunpack.c.l.b16 %v89
    %v229 = vunpack.c.h.b16 %v89
    %v230 = vunpack.c.l.b16 %v90
    %v231 = vunpack.c.h.b16 %v90
    %v232 = vunpack.c.l.b16 %v91
    %v233 = vunpack.c.h.b16 %v91
    %v234 = vunpack.c.l.b16 %v92
    %v235 = vunpack.c.h.b16 %v92
    %v236 = vunpack.c.l.b16 %v93
    %v237 = vunpack.c.h.b16 %v93
    %v238 = vunpack.c.l.b16 %v94
    %v239 = vunpack.c.h.b16 %v94
    %v240 = vunpack.c.l.b16 %v95
    %v241 = vunpack.c.h.b16 %v95
    %v242 = vunpack.c.l.b16 %v96
    %v243 = vunpack.c.h.b16 %v96
    %v244 = vunpack.c.l.b16 %v97
    %v245 = vunpack.c.h.b16 %v97
    %v246 = vunpack.c.l.b16 %v98
    %v247 = vunpack.c.h.b16 %v98
    %v248 = vunpack.c.l.b16 %v99
    %v249 = vunpack.c.h.b16 %v99
    %v250 = vpack.c.b16 %v160, %v154
    %v251 = vpack.c.b16 %v161, %v155
    %v252 = vpack.c.b16 %v162, %v156
    %v253 = vpack.c.b16 %v163, %v157
    %v254 = vpack.c.b16 %v164, %v158
    %v255 = vpack.c.b16 %v165, %v159
    %v256 = vpack.c.b16 %v172, %v166
    %v257 = vpack.c.b16 %v173, %v167
    %v258 = vpack.c.b16 %v174, %v168
    %v259 = vpack.c.b16 %v175, %v169
    %v260 = vpack.c.b16 %v176, %v170
    %v261 = vpack.c.b16 %v177, %v171
    %v262 = vpack.c.b16 %v184, %v178
    %v263 = vpack.c.b16 %v185, %v179
    %v264 = vpack.c.b16 %v186, %v180
    %v265 = vpack.c.b16 %v187, %v181
    %v266 = vpack.c.b16 %v188, %v182
    %v267 = vpack.c.b16 %v189, %v183
    %v268 = vpack.c.b16 %v196, %v190
    %v269 = vpack.c.b16 %v197, %v191
    %v270 = vpack.c.b16 %v198, %v192
    %v271 = vpack.c.b16 %v199, %v193
    %v272 = vpack.c.b16 %v200, %v194
    %v273 = vpack.c.b16 %v201, %v195
    %v274 = vpack.c.b16 %v208, %v202
    %v275 = vpack.c.b16 %v209, %v203
    %v276 = vpack.c.b16 %v210, %v204
    %v277 = vpack.c.b16 %v211, %v205
    %v278 = vpack.c.b16 %v212, %v206
    %v279 = vpack.c.b16 %v213, %v207
    %v280 = vpack.c.b16 %v220, %v214
    %v281 = vpack.c.b16 %v221, %v215
    %v282 = vpack.c.b16 %v222, %v216
    %v283 = vpack.c.b16 %v223, %v217
    %v284 = vpack.c.b16 %v224, %v218
    %v285 = vpack.c.b16 %v225, %v219
    %v286 = vpack.c.b16 %v232, %v226
    %v287 = vpack.c.b16 %v233, %v227
    %v288 = vpack.c.b16 %v234, %v228
    %v289 = vpack.c.b16 %v235, %v229
    %v290 = vpack.c.b16 %v236, %v230
    %v291 = vpack.c.b16 %v237, %v231
    %v292 = vpack.c.b16 %v244, %v238
    %v293 = vpack.c.b16 %v245, %v239
    %v294 = vpack.c.b16 %v246, %v240
    %v295 = vpack.c.b16 %v247, %v241
    %v296 = vpack.c.b16 %v248, %v242
    %v297 = vpack.c.b16 %v249, %v243
    %346 = vmatprep.subr.bf16.mxu0 %v251
    %347 = vmatpush1.bf16.msra.mxu0 %v250
    %348 = vmatprep.subr.bf16.mxu0 %v257
    %349 = vmatpush1.bf16.msra.mxu0 %v256
    %350 = vmatprep.subr.bf16.mxu0 %v263
    %351 = vmatpush1.bf16.msra.mxu0 %v262
    %352 = vmatprep.subr.bf16.mxu0 %v269
    %353 = vmatpush1.bf16.msra.mxu0 %v268
    %354 = vmatprep.subr.bf16.mxu0 %v275
    %355 = vmatpush1.bf16.msra.mxu0 %v274
    %356 = vmatprep.subr.bf16.mxu0 %v281
    %357 = vmatpush1.bf16.msra.mxu0 %v280
    %358 = vmatprep.subr.bf16.mxu0 %v287
    %359 = vmatpush1.bf16.msra.mxu0 %v286
    %360 = vmatprep.subr.bf16.mxu0 %v293
    %361 = vmatpush1.bf16.msra.mxu0 %v292
    %362 = vmatprep.subr.bf16.mxu0 0
    %363 = vmatpush1.bf16.msra.mxu0 0
    %364 = vmatprep.subr.bf16.mxu0 0
    %365 = vmatpush1.bf16.msra.mxu0 0
    %366 = vmatprep.subr.bf16.mxu0 0
    %367 = vmatpush1.bf16.msra.mxu0 0
    %368 = vmatprep.subr.bf16.mxu0 0
    %369 = vmatpush1.bf16.msra.mxu0 0
    %370 = vmatprep.subr.bf16.mxu0 0
    %371 = vmatpush1.bf16.msra.mxu0 0
    %372 = vmatprep.subr.bf16.mxu0 0
    %373 = vmatpush1.bf16.msra.mxu0 0
    %374 = vmatprep.subr.bf16.mxu0 0
    %375 = vmatpush1.bf16.msra.mxu0 0
    %376 = vmatprep.subr.bf16.mxu0 0
    %377 = vmatpush1.bf16.msra.mxu0 0
    %378 = vmatprep.mubr.bf16.mxu0 0
    %379 = vmatmul.mubr.bf16.gmra.mrb[0].mxu0 %v104
    %v380 = vpop.f32.mrb[0].mxu0
    %v381 = vadd.f32 0.0, %v380
    %v382 = vpop.f32.mrb[0].mxu0
    %v383 = vadd.f32 0.0, %v382
    %v384 = vpop.f32.mrb[0].mxu0
    %v385 = vadd.f32 0.0, %v384
    %v386 = vpop.f32.mrb[0].mxu0
    %v387 = vadd.f32 0.0, %v386
    %388 = vdwg.mxu0
    %389 = vmatprep.subr.bf16.mxu0 %v253
    %390 = vmatpush1.bf16.msra.mxu0 %v252
    %391 = vmatprep.subr.bf16.mxu0 %v259
    %392 = vmatpush1.bf16.msra.mxu0 %v258
    %393 = vmatprep.subr.bf16.mxu0 %v265
    %394 = vmatpush1.bf16.msra.mxu0 %v264
    %395 = vmatprep.subr.bf16.mxu0 %v271
    %396 = vmatpush1.bf16.msra.mxu0 %v270
    %397 = vmatprep.subr.bf16.mxu0 %v277
    %398 = vmatpush1.bf16.msra.mxu0 %v276
    %399 = vmatprep.subr.bf16.mxu0 %v283
    %400 = vmatpush1.bf16.msra.mxu0 %v282
    %401 = vmatprep.subr.bf16.mxu0 %v289
    %402 = vmatpush1.bf16.msra.mxu0 %v288
    %403 = vmatprep.subr.bf16.mxu0 %v295
    %404 = vmatpush1.bf16.msra.mxu0 %v294
    %405 = vmatprep.subr.bf16.mxu0 0
    %406 = vmatpush1.bf16.msra.mxu0 0
    %407 = vmatprep.subr.bf16.mxu0 0
    %408 = vmatpush1.bf16.msra.mxu0 0
    %409 = vmatprep.subr.bf16.mxu0 0
    %410 = vmatpush1.bf16.msra.mxu0 0
    %411 = vmatprep.subr.bf16.mxu0 0
    %412 = vmatpush1.bf16.msra.mxu0 0
    %413 = vmatprep.subr.bf16.mxu0 0
    %414 = vmatpush1.bf16.msra.mxu0 0
    %415 = vmatprep.subr.bf16.mxu0 0
    %416 = vmatpush1.bf16.msra.mxu0 0
    %417 = vmatprep.subr.bf16.mxu0 0
    %418 = vmatpush1.bf16.msra.mxu0 0
    %419 = vmatprep.subr.bf16.mxu0 0
    %420 = vmatpush1.bf16.msra.mxu0 0
    %421 = vmatprep.mubr.bf16.mxu0 0
    %422 = vmatmul.mubr.bf16.gmra.mrb[0].mxu0 %v104
    %v423 = vpop.f32.mrb[0].mxu0
    %v424 = vadd.f32 0.0, %v423
    %v425 = vpop.f32.mrb[0].mxu0
    %v426 = vadd.f32 0.0, %v425
    %v427 = vpop.f32.mrb[0].mxu0
    %v428 = vadd.f32 0.0, %v427
    %v429 = vpop.f32.mrb[0].mxu0
    %v430 = vadd.f32 0.0, %v429
    %431 = vdwg.mxu0
    %432 = vmatprep.subr.bf16.mxu0 %v255
    %433 = vmatpush1.bf16.msra.mxu0 %v254
    %434 = vmatprep.subr.bf16.mxu0 %v261
    %435 = vmatpush1.bf16.msra.mxu0 %v260
    %436 = vmatprep.subr.bf16.mxu0 %v267
    %437 = vmatpush1.bf16.msra.mxu0 %v266
    %438 = vmatprep.subr.bf16.mxu0 %v273
    %439 = vmatpush1.bf16.msra.mxu0 %v272
    %440 = vmatprep.subr.bf16.mxu0 %v279
    %441 = vmatpush1.bf16.msra.mxu0 %v278
    %442 = vmatprep.subr.bf16.mxu0 %v285
    %443 = vmatpush1.bf16.msra.mxu0 %v284
    %444 = vmatprep.subr.bf16.mxu0 %v291
    %445 = vmatpush1.bf16.msra.mxu0 %v290
    %446 = vmatprep.subr.bf16.mxu0 %v297
    %447 = vmatpush1.bf16.msra.mxu0 %v296
    %448 = vmatprep.subr.bf16.mxu0 0
    %449 = vmatpush1.bf16.msra.mxu0 0
    %450 = vmatprep.subr.bf16.mxu0 0
    %451 = vmatpush1.bf16.msra.mxu0 0
    %452 = vmatprep.subr.bf16.mxu0 0
    %453 = vmatpush1.bf16.msra.mxu0 0
    %454 = vmatprep.subr.bf16.mxu0 0
    %455 = vmatpush1.bf16.msra.mxu0 0
    %456 = vmatprep.subr.bf16.mxu0 0
    %457 = vmatpush1.bf16.msra.mxu0 0
    %458 = vmatprep.subr.bf16.mxu0 0
    %459 = vmatpush1.bf16.msra.mxu0 0
    %460 = vmatprep.subr.bf16.mxu0 0
    %461 = vmatpush1.bf16.msra.mxu0 0
    %462 = vmatprep.subr.bf16.mxu0 0
    %463 = vmatpush1.bf16.msra.mxu0 0
    %464 = vmatprep.mubr.bf16.mxu0 0
    %465 = vmatmul.mubr.bf16.gmra.mrb[0].mxu0 %v104
    %v466 = vpop.f32.mrb[0].mxu0
    %v467 = vadd.f32 0.0, %v466
    %v468 = vpop.f32.mrb[0].mxu0
    %v469 = vadd.f32 0.0, %v468
    %v470 = vpop.f32.mrb[0].mxu0
    %v471 = vadd.f32 0.0, %v470
    %v472 = vpop.f32.mrb[0].mxu0
    %v473 = vadd.f32 0.0, %v472
    %474 = vdwg.mxu0
    %v475 = vxor.u32 %v381, 2147483648
    %v476 = vxor.u32 %v383, 2147483648
    %v477 = vxor.u32 %v424, 2147483648
    %v478 = vxor.u32 %v385, 2147483648
    %v479 = vxor.u32 %v387, 2147483648
    %v480 = vxor.u32 %v428, 2147483648
    %v481 = vmul.f32 %v475, 1.442695
    %v482 = vpow.pop %v481
    %v483 = vmul.f32 %v476, 1.442695
    %v484 = vpow.pop %v483
    %v485 = vmul.f32 %v477, 1.442695
    %v486 = vpow.pop %v485
    %v487 = vmul.f32 %v478, 1.442695
    %v488 = vpow.pop %v487
    %v489 = vmul.f32 %v479, 1.442695
    %v490 = vpow.pop %v489
    %v491 = vmul.f32 %v480, 1.442695
    %v492 = vpow.pop %v491
    %v493 = vadd.f32 %v482, 1.0
    %v494 = vadd.f32 %v484, 1.0
    %v495 = vadd.f32 %v486, 1.0
    %v496 = vadd.f32 %v488, 1.0
    %v497 = vadd.f32 %v490, 1.0
    %v498 = vadd.f32 %v492, 1.0
    %v499 = vrcp.pop %v493
    %v500 = vmul.f32 1.0, %v499
    %v501 = vrcp.pop %v494
    %v502 = vmul.f32 1.0, %v501
    %v503 = vrcp.pop %v495
    %v504 = vmul.f32 1.0, %v503
    %v505 = vrcp.pop %v496
    %v506 = vmul.f32 1.0, %v505
    %v507 = vrcp.pop %v497
    %v508 = vmul.f32 1.0, %v507
    %v509 = vrcp.pop %v498
    %v510 = vmul.f32 1.0, %v509
    %v511 = vmul.f32 %v381, %v500
    %v512 = vmul.f32 %v383, %v502
    %v513 = vmul.f32 %v424, %v504
    %v514 = vmul.f32 %v385, %v506
    %v515 = vmul.f32 %v387, %v508
    %v516 = vmul.f32 %v428, %v510
    %v517 = vmul.f32 %v511, %v426
    %v518 = vmul.f32 %v512, %v467
    %v519 = vmul.f32 %v513, %v469
    %v520 = vmul.f32 %v514, %v430
    %v521 = vmul.f32 %v515, %v471
    %v522 = vmul.f32 %v516, %v473
    %v523 = vld [vmem:[#allocation2] sm:$0xff]
    %v524 = vld [vmem:[#allocation2 + $0x8] sm:$0xff]
    %v525 = vpack.c.bf16 %v520, %v517
    %v526 = vpack.c.bf16 %v521, %v518
    %v527 = vpack.c.bf16 %v522, %v519
    %v528 = vld [vmem:[#allocation6] sm:$0xf]
    %v529 = vld [vmem:[#allocation6 + $0x4] sm:$0xf]
    %v530 = vld [vmem:[#allocation6 + $0x8] sm:$0xf]
    %v531 = vld [vmem:[#allocation6 + $0xc] sm:$0xf]
    %v532 = vld [vmem:[#allocation6 + $0x10] sm:$0xf]
    %v533 = vld [vmem:[#allocation6 + $0x14] sm:$0xf]
    %v534 = vld [vmem:[#allocation6 + $0x18] sm:$0xf]
    %v535 = vld [vmem:[#allocation6 + $0x1c] sm:$0xf]
    %v536 = vld [vmem:[#allocation6 + $0x20] sm:$0xf]
    %v537 = vld [vmem:[#allocation6 + $0x24] sm:$0xf]
    %v538 = vld [vmem:[#allocation6 + $0x28] sm:$0xf]
    %v539 = vld [vmem:[#allocation6 + $0x2c] sm:$0xf]
    %v540 = vld [vmem:[#allocation6 + $0x30] sm:$0xf]
    %v541 = vld [vmem:[#allocation6 + $0x34] sm:$0xf]
    %v542 = vld [vmem:[#allocation6 + $0x38] sm:$0xf]
    %v543 = vld [vmem:[#allocation6 + $0x3c] sm:$0xf]
    %v544 = vld [vmem:[#allocation6 + $0x40] sm:$0xf]
    %v545 = vld [vmem:[#allocation6 + $0x44] sm:$0xf]
    %v546 = vld [vmem:[#allocation6 + $0x48] sm:$0xf]
    %v547 = vld [vmem:[#allocation6 + $0x4c] sm:$0xf]
    %v548 = vld [vmem:[#allocation6 + $0x50] sm:$0xf]
    %v549 = vld [vmem:[#allocation6 + $0x54] sm:$0xf]
    %v550 = vld [vmem:[#allocation6 + $0x58] sm:$0xf]
    %v551 = vld [vmem:[#allocation6 + $0x5c] sm:$0xf]
    %v552 = vld [vmem:[#allocation6 + $0x60] sm:$0xf]
    %v553 = vld [vmem:[#allocation6 + $0x64] sm:$0xf]
    %v554 = vld [vmem:[#allocation6 + $0x68] sm:$0xf]
    %v555 = vld [vmem:[#allocation6 + $0x6c] sm:$0xf]
    %v556 = vld [vmem:[#allocation6 + $0x70] sm:$0xf]
    %v557 = vld [vmem:[#allocation6 + $0x74] sm:$0xf]
    %v558 = vld [vmem:[#allocation6 + $0x78] sm:$0xf]
    %v559 = vld [vmem:[#allocation6 + $0x7c] sm:$0xf]
    %v560 = vld [vmem:[#allocation6 + $0x80] sm:$0xf]
    %v561 = vld [vmem:[#allocation6 + $0x84] sm:$0xf]
    %v562 = vld [vmem:[#allocation6 + $0x88] sm:$0xf]
    %v563 = vld [vmem:[#allocation6 + $0x8c] sm:$0xf]
    %v564 = vld [vmem:[#allocation6 + $0x90] sm:$0xf]
    %v565 = vld [vmem:[#allocation6 + $0x94] sm:$0xf]
    %v566 = vld [vmem:[#allocation6 + $0x98] sm:$0xf]
    %v567 = vld [vmem:[#allocation6 + $0x9c] sm:$0xf]
    %v568 = vld [vmem:[#allocation6 + $0xa0] sm:$0xf]
    %v569 = vld [vmem:[#allocation6 + $0xa4] sm:$0xf]
    %v570 = vld [vmem:[#allocation6 + $0xa8] sm:$0xf]
    %v571 = vld [vmem:[#allocation6 + $0xac] sm:$0xf]
    %v572 = vld [vmem:[#allocation6 + $0xb0] sm:$0xf]
    %v573 = vld [vmem:[#allocation6 + $0xb4] sm:$0xf]
    %v574 = vld [vmem:[#allocation6 + $0xb8] sm:$0xf]
    %v575 = vld [vmem:[#allocation6 + $0xbc] sm:$0xf]
    %v624 = vunpack.c.l.b16 %v528
    %v625 = vunpack.c.l.b16 %v529
    %v626 = vunpack.c.l.b16 %v530
    %v627 = vunpack.c.l.b16 %v531
    %v628 = vunpack.c.l.b16 %v532
    %v629 = vunpack.c.l.b16 %v533
    %v630 = vunpack.c.l.b16 %v534
    %v631 = vunpack.c.l.b16 %v535
    %v632 = vunpack.c.l.b16 %v536
    %v633 = vunpack.c.l.b16 %v537
    %v634 = vunpack.c.l.b16 %v538
    %v635 = vunpack.c.l.b16 %v539
    %v636 = vunpack.c.l.b16 %v540
    %v637 = vunpack.c.l.b16 %v541
    %v638 = vunpack.c.l.b16 %v542
    %v639 = vunpack.c.l.b16 %v543
    %v640 = vunpack.c.l.b16 %v544
    %v641 = vunpack.c.l.b16 %v545
    %v642 = vunpack.c.l.b16 %v546
    %v643 = vunpack.c.l.b16 %v547
    %v644 = vunpack.c.l.b16 %v548
    %v645 = vunpack.c.l.b16 %v549
    %v646 = vunpack.c.l.b16 %v550
    %v647 = vunpack.c.l.b16 %v551
    %v648 = vunpack.c.l.b16 %v552
    %v649 = vunpack.c.l.b16 %v553
    %v650 = vunpack.c.l.b16 %v554
    %v651 = vunpack.c.l.b16 %v555
    %v652 = vunpack.c.l.b16 %v556
    %v653 = vunpack.c.l.b16 %v557
    %v654 = vunpack.c.l.b16 %v558
    %v655 = vunpack.c.l.b16 %v559
    %v656 = vunpack.c.l.b16 %v560
    %v657 = vunpack.c.l.b16 %v561
    %v658 = vunpack.c.l.b16 %v562
    %v659 = vunpack.c.l.b16 %v563
    %v660 = vunpack.c.l.b16 %v564
    %v661 = vunpack.c.l.b16 %v565
    %v662 = vunpack.c.l.b16 %v566
    %v663 = vunpack.c.l.b16 %v567
    %v664 = vunpack.c.l.b16 %v568
    %v665 = vunpack.c.l.b16 %v569
    %v666 = vunpack.c.l.b16 %v570
    %v667 = vunpack.c.l.b16 %v571
    %v668 = vunpack.c.l.b16 %v572
    %v669 = vunpack.c.l.b16 %v573
    %v670 = vunpack.c.l.b16 %v574
    %v671 = vunpack.c.l.b16 %v575
    %v672 = vpack.c.b16 %v625, %v624
    %v673 = vpack.c.b16 %v627, %v626
    %v674 = vpack.c.b16 %v629, %v628
    %v675 = vpack.c.b16 %v631, %v630
    %v676 = vpack.c.b16 %v633, %v632
    %v677 = vpack.c.b16 %v635, %v634
    %v678 = vpack.c.b16 %v637, %v636
    %v679 = vpack.c.b16 %v639, %v638
    %v680 = vpack.c.b16 %v641, %v640
    %v681 = vpack.c.b16 %v643, %v642
    %v682 = vpack.c.b16 %v645, %v644
    %v683 = vpack.c.b16 %v647, %v646
    %v684 = vpack.c.b16 %v649, %v648
    %v685 = vpack.c.b16 %v651, %v650
    %v686 = vpack.c.b16 %v653, %v652
    %v687 = vpack.c.b16 %v655, %v654
    %v688 = vpack.c.b16 %v657, %v656
    %v689 = vpack.c.b16 %v659, %v658
    %v690 = vpack.c.b16 %v661, %v660
    %v691 = vpack.c.b16 %v663, %v662
    %v692 = vpack.c.b16 %v665, %v664
    %v693 = vpack.c.b16 %v667, %v666
    %v694 = vpack.c.b16 %v669, %v668
    %v695 = vpack.c.b16 %v671, %v670
    %720 = vmatprep.subr.bf16.mxu0 0
    %721 = vmatpush1.bf16.msra.mxu0 %v672
    %722 = vmatprep.subr.bf16.mxu0 0
    %723 = vmatpush1.bf16.msra.mxu0 %v673
    %724 = vmatprep.subr.bf16.mxu0 0
    %725 = vmatpush1.bf16.msra.mxu0 %v674
    %726 = vmatprep.subr.bf16.mxu0 0
    %727 = vmatpush1.bf16.msra.mxu0 %v675
    %728 = vmatprep.subr.bf16.mxu0 0
    %729 = vmatpush1.bf16.msra.mxu0 %v676
    %730 = vmatprep.subr.bf16.mxu0 0
    %731 = vmatpush1.bf16.msra.mxu0 %v677
    %732 = vmatprep.subr.bf16.mxu0 0
    %733 = vmatpush1.bf16.msra.mxu0 %v678
    %734 = vmatprep.subr.bf16.mxu0 0
    %735 = vmatpush1.bf16.msra.mxu0 %v679
    %736 = vmatprep.subr.bf16.mxu0 0
    %737 = vmatpush1.bf16.msra.mxu0 %v680
    %738 = vmatprep.subr.bf16.mxu0 0
    %739 = vmatpush1.bf16.msra.mxu0 %v681
    %740 = vmatprep.subr.bf16.mxu0 0
    %741 = vmatpush1.bf16.msra.mxu0 %v682
    %742 = vmatprep.subr.bf16.mxu0 0
    %743 = vmatpush1.bf16.msra.mxu0 %v683
    %744 = vmatprep.subr.bf16.mxu0 0
    %745 = vmatpush1.bf16.msra.mxu0 %v684
    %746 = vmatprep.subr.bf16.mxu0 0
    %747 = vmatpush1.bf16.msra.mxu0 %v685
    %748 = vmatprep.subr.bf16.mxu0 0
    %749 = vmatpush1.bf16.msra.mxu0 %v686
    %750 = vmatprep.subr.bf16.mxu0 0
    %751 = vmatpush1.bf16.msra.mxu0 %v687
    %752 = vmatprep.mubr.bf16.mxu0 %v526
    %753 = vmatmul.mubr.bf16.gmra.mrb[0].mxu0 %v525
    %v754 = vpop.f32.mrb[0].mxu0
    %v755 = vadd.f32 0.0, %v754
    %v756 = vpop.f32.mrb[0].mxu0
    %v757 = vpop.f32.mrb[0].mxu0
    %v758 = vadd.f32 0.0, %v757
    %v759 = vpop.f32.mrb[0].mxu0
    %760 = vdwg.mxu0
    %761 = vmatprep.subr.bf16.mxu0 0
    %762 = vmatpush1.bf16.msra.mxu0 %v688
    %763 = vmatprep.subr.bf16.mxu0 0
    %764 = vmatpush1.bf16.msra.mxu0 %v689
    %765 = vmatprep.subr.bf16.mxu0 0
    %766 = vmatpush1.bf16.msra.mxu0 %v690
    %767 = vmatprep.subr.bf16.mxu0 0
    %768 = vmatpush1.bf16.msra.mxu0 %v691
    %769 = vmatprep.subr.bf16.mxu0 0
    %770 = vmatpush1.bf16.msra.mxu0 %v692
    %771 = vmatprep.subr.bf16.mxu0 0
    %772 = vmatpush1.bf16.msra.mxu0 %v693
    %773 = vmatprep.subr.bf16.mxu0 0
    %774 = vmatpush1.bf16.msra.mxu0 %v694
    %775 = vmatprep.subr.bf16.mxu0 0
    %776 = vmatpush1.bf16.msra.mxu0 %v695
    %777 = vmatprep.subr.bf16.mxu0 0
    %778 = vmatpush1.bf16.msra.mxu0 0
    %779 = vmatprep.subr.bf16.mxu0 0
    %780 = vmatpush1.bf16.msra.mxu0 0
    %781 = vmatprep.subr.bf16.mxu0 0
    %782 = vmatpush1.bf16.msra.mxu0 0
    %783 = vmatprep.subr.bf16.mxu0 0
    %784 = vmatpush1.bf16.msra.mxu0 0
    %785 = vmatprep.subr.bf16.mxu0 0
    %786 = vmatpush1.bf16.msra.mxu0 0
    %787 = vmatprep.subr.bf16.mxu0 0
    %788 = vmatpush1.bf16.msra.mxu0 0
    %789 = vmatprep.subr.bf16.mxu0 0
    %790 = vmatpush1.bf16.msra.mxu0 0
    %791 = vmatprep.subr.bf16.mxu0 0
    %792 = vmatpush1.bf16.msra.mxu0 0
    %793 = vmatprep.mubr.bf16.mxu0 0
    %794 = vmatmul.mubr.bf16.gmra.mrb[0].mxu0 %v527
    %v795 = vpop.f32.mrb[0].mxu0
    %v796 = vadd.f32 %v755, %v795
    %v797 = vpop.f32.mrb[0].mxu0
    %v798 = vpop.f32.mrb[0].mxu0
    %v799 = vadd.f32 %v758, %v798
    %v800 = vpop.f32.mrb[0].mxu0
    %801 = vdwg.mxu0
    %v802 = vadd.f32 %v523, %v796
    %v803 = vadd.f32 %v524, %v799
    %804 = vst [vmem:[#allocation2] sm:$0xff] %v802
    %805 = vst [vmem:[#allocation2 + $0x8] sm:$0xff] %v803
    // Predicated region
    $region26: #{feed_forward.1} parent=1 // pred_check
      %p806 = pneg %p44
    $region27: #{feed_forward.1} parent=1 // pred_check_branch
      %808 = sbr.rel (%p806) target = $region29
    $region28: #{feed_forward.1} parent=1 // pred_region
      %v809 = vld [vmem:[#allocation2] sm:$0xff]
      %v810 = vld [vmem:[#allocation2 + $0x8] sm:$0xff]
      %811 = vst [vmem:[#allocation8] sm:$0xff] %v809
      %812 = vst [vmem:[#allocation8 + $0x8] sm:$0xff] %v810
    $region29: #{feed_forward.1} parent=1 // pred_fallthru
      _
    // Predicated region
    $region30: #{feed_forward.1} parent=1 // pred_check
      _
    $region31: #{feed_forward.1} parent=1 // pred_check_branch
      %814 = sbr.rel (0) target = $region33
    $region32: #{feed_forward.1} parent=1 // pred_region
      %s816 = ssub.s32 256, 256
      %817 = vsyncadd [#allocation5], %s816
      %s818 = sshll.u32 [#allocation8], 4
      %s819 = int_to_ptr.vmem [resolvable:$true] %s818
      %824 = dma.vmem_to_hbm [thread:$0]  %s819, 256, %s3, [#allocation5], 128, 128, 8
    $region33: #{feed_forward.1} parent=1 // pred_fallthru
      _
    // Predicated region
    $region34: #{feed_forward.1} parent=1 // pred_check
      _
    $region35: #{feed_forward.1} parent=1 // pred_check_branch
      %826 = sbr.rel (0) target = $region37
    $region36: #{feed_forward.1} parent=1 // pred_region
      %827 = dma.done [#allocation5], 256
    $region37: #{feed_forward.1} parent=1 // pred_fallthru
      _
    %828 = vsyncpa [#allocation4], 1
    %829 = vsyncpa [#allocation7], 1
    %830 = vsyncpa [#allocation5], 1

</llo_original>
